<compile_context>
chip_gen: v7x
topology: tpu7x:2x2x1
jax: 0.10.0
libtpu: 0.0.40
codegen_flags: <defaults>
</compile_context>

<pallas_src>
import jax
import jax.numpy as jnp
from jax import lax
from jax.experimental import pallas as pl
from jax.experimental.pallas import tpu as pltpu


def _scaled_gelu_kernel(alpha_ref, x_ref, o_ref):
    # alpha_ref: (tm, 1) f32   x_ref: (tm, tn)   o_ref: (tm, tn)
    x = x_ref[...].astype(jnp.float32)
    a = alpha_ref[...]                      # already float32
    z = a * x                               # per-row (= per-channel) scaling
    # exact GELU: 0.5 * z * (1 + erf(z / sqrt(2)))  -- matches F.gelu default
    inv_sqrt2 = jnp.float32(0.7071067811865476)
    y = jnp.float32(0.5) * z * (jnp.float32(1.0) + lax.erf(z * inv_sqrt2))
    o_ref[...] = y.astype(o_ref.dtype)


def _sublane_multiple(dtype) -> int:
    itemsize = jnp.dtype(dtype).itemsize
    if itemsize >= 4:
        return 8
    if itemsize == 2:
        return 16
    return 32


def input_scaled_gelu(x, alpha, *, row_tile=None, lane_tile=None):
    """x: (N, C, H, W), alpha: (C,) -> gelu(alpha[None,:,None,None] * x)."""
    N, C, H, W = x.shape
    HW = H * W
    NC = N * C
    itemsize = jnp.dtype(x.dtype).itemsize
    sub = _sublane_multiple(x.dtype)

    # --- pad so last dim is lane-dense (mult of 128) and rows are sublane-aligned ---
    HW_pad = ((HW + 127) // 128) * 128
    NC_pad = ((NC + sub - 1) // sub) * sub

    x2d = x.reshape(NC, HW)
    if HW_pad != HW or NC_pad != NC:
        x2d = jnp.pad(x2d, ((0, NC_pad - NC), (0, HW_pad - HW)))

    # alpha expanded per (n, c) row, kept in float32 (no precision loss vs reference)
    alpha_col = jnp.tile(alpha.astype(jnp.float32), N).reshape(NC, 1)
    if NC_pad != NC:
        alpha_col = jnp.pad(alpha_col, ((0, NC_pad - NC), (0, 0)))

    # --- generation-aware VMEM budgeting ---
    try:
        vmem_cap = int(pltpu.get_tpu_info().vmem_capacity_bytes)
    except Exception:  # pragma: no cover - conservative fallback
        vmem_cap = 128 * 1024 * 1024
    # total live (double-buffered in + out) tile bytes budget:
    #   ~16 MiB on 128 MiB-VMEM chips (v5e/v6e), ~12.8 MiB on 64 MiB v7x.
    budget = min(16 * 1024 * 1024, vmem_cap // 5)

    # lane tile: large multiple of 128 (sweet spot 512-2048), clamped to HW_pad
    if lane_tile is None:
        lane_tile = 2048
    tn = min(max(128, (int(lane_tile) // 128) * 128), HW_pad)

    # row tile: largest sublane-aligned count keeping 2x(x tile + out tile) in budget
    if row_tile is None:
        max_rows = budget // max(1, 4 * tn * itemsize)    # 2 bufs x (in + out)
        row_tile = min(NC_pad, (max_rows // sub) * sub, 512)
    tm = max(sub, min((int(row_tile) // sub) * sub, NC_pad))

    grid = (pl.cdiv(NC_pad, tm), pl.cdiv(HW_pad, tn))

    # explicit scoped-VMEM limit sized to the tiles plus headroom (below physical)
    live_bytes = 2 * (2 * tm * tn * itemsize) + 2 * tm * 4
    vmem_limit = int(min(vmem_cap * 3 // 4,
                         max(2 * live_bytes, 32 * 1024 * 1024)))

    out2d = pl.pallas_call(
        _scaled_gelu_kernel,
        out_shape=jax.ShapeDtypeStruct((NC_pad, HW_pad), x.dtype),
        grid_spec=pltpu.PrefetchScalarGridSpec(
            num_scalar_prefetch=0,
            grid=grid,
            in_specs=[
                pl.BlockSpec((tm, 1), lambda i, j: (i, 0)),
                pl.BlockSpec((tm, tn), lambda i, j: (i, j)),
            ],
            out_specs=pl.BlockSpec((tm, tn), lambda i, j: (i, j)),
        ),
        compiler_params=pltpu.CompilerParams(
            dimension_semantics=("parallel", "parallel"),
            vmem_limit_bytes=vmem_limit,
        ),
    )(alpha_col, x2d)

    if HW_pad != HW or NC_pad != NC:
        out2d = out2d[:NC, :HW]
    return out2d.reshape(N, C, H, W)


def _reference(x, alpha):
    z = alpha[None, :, None, None].astype(jnp.float32) * x.astype(jnp.float32)
    return jax.nn.gelu(z, approximate=False).astype(x.dtype)


if __name__ == "__main__":
    key = jax.random.PRNGKey(0)
    k_x, k_a = jax.random.split(key)

    N, C, H, W = 2, 4, 16, 16
    x = jax.random.normal(k_x, (N, C, H, W), dtype=jnp.float32)

    # deterministic parameter init mirroring the module:
    # alpha ~ randn(C), normalized to unit L2 norm
    alpha = jax.random.normal(k_a, (C,), dtype=jnp.float32)
    alpha = alpha / jnp.linalg.norm(alpha)

    fn = jax.jit(input_scaled_gelu)
    out = fn(x, alpha)
    out = jax.block_until_ready(out)

    ref = _reference(x, alpha)
    assert out.shape == (N, C, H, W)
    assert jnp.allclose(out, ref, atol=1e-5, rtol=1e-5), "mismatch vs reference"

    print("KERNEL_OK")
</pallas_src>

<mosaic_0001>
module attributes {stable_mosaic.version = 11 : i64} {
  func.func @_scaled_gelu_kernel(%arg0: i32, %arg1: i32, %arg2: memref<8x1xf32, #tpu.memory_space<vmem>>, %arg3: memref<8x256xf32, #tpu.memory_space<vmem>>, %arg4: memref<8x256xf32, #tpu.memory_space<vmem>>) attributes {dimension_semantics = [#tpu.dimension_semantics<parallel>, #tpu.dimension_semantics<parallel>], iteration_bounds = array<i64: 1, 1>, scalar_prefetch = 0 : i64, scratch_operands = 0 : i64, tpu.core_type = #tpu.core_type<tc>, window_params = [{transform_indices = @transform_0, window_bounds = array<i64: 8, 1>}, {transform_indices = @transform_1, window_bounds = array<i64: 8, 256>}, {transform_indices = @transform_2, window_bounds = array<i64: 8, 256>}]} {
    %c0 = arith.constant 0 : index
    %c0_0 = arith.constant 0 : index
    %0 = vector.load %arg3[%c0, %c0_0] : memref<8x256xf32, #tpu.memory_space<vmem>>, vector<8x256xf32>
    %c0_1 = arith.constant 0 : index
    %c0_2 = arith.constant 0 : index
    %1 = vector.load %arg2[%c0_1, %c0_2] : memref<8x1xf32, #tpu.memory_space<vmem>>, vector<8x1xf32>
    %2 = vector.broadcast %1 : vector<8x1xf32> to vector<8x256xf32>
    %3 = arith.mulf %2, %0 : vector<8x256xf32>
    %cst = arith.constant 5.000000e-01 : f32
    %4 = vector.broadcast %cst : f32 to vector<8x256xf32>
    %5 = arith.mulf %4, %3 : vector<8x256xf32>
    %cst_3 = arith.constant 0.707106769 : f32
    %6 = vector.broadcast %cst_3 : f32 to vector<8x256xf32>
    %7 = arith.mulf %3, %6 : vector<8x256xf32>
    %8 = math.erf %7 : vector<8x256xf32>
    %cst_4 = arith.constant 1.000000e+00 : f32
    %9 = vector.broadcast %cst_4 : f32 to vector<8x256xf32>
    %10 = arith.addf %9, %8 : vector<8x256xf32>
    %11 = arith.mulf %5, %10 : vector<8x256xf32>
    %c0_5 = arith.constant 0 : index
    %c0_6 = arith.constant 0 : index
    %12 = vector.load %arg4[%c0_5, %c0_6] : memref<8x256xf32, #tpu.memory_space<vmem>>, vector<8x256xf32>
    tpu.vector_store %arg4[%c0_5, %c0_6], %11 {strides = array<i32>} : memref<8x256xf32, #tpu.memory_space<vmem>>, vector<8x256xf32>,
    return
  }
  func.func @transform_0(%arg0: i32, %arg1: i32) -> (i32, i32) {
    %c0_i32 = arith.constant 0 : i32
    %c0_i32_0 = arith.constant 0 : i32
    return %arg0, %c0_i32 : i32, i32
  }
  func.func @transform_1(%arg0: i32, %arg1: i32) -> (i32, i32) {
    %c0_i32 = arith.constant 0 : i32
    return %arg0, %arg1 : i32, i32
  }
  func.func @transform_2(%arg0: i32, %arg1: i32) -> (i32, i32) {
    %c0_i32 = arith.constant 0 : i32
    return %arg0, %arg1 : i32, i32
  }
}

</mosaic_0001>

<llo_original>
// kernel: tile.8
$region0: #{tile.8}
  #allocation0 [shape = 's32[1]{0}', space=sflag, size = 0x4, scoped, tag = 'scoped memory for tile.8']
  %s0 = inlined_call_operand.vmem [shape: f32[4], index: 0, kind: input, shape index: {}]
  %s1 = inlined_call_operand.vmem [shape: f32[2,4], index: 1, kind: output, shape index: {}]
  // Predicated region
  $region2: #{tile.8} parent=0 // pred_check
    _
  $region3: #{tile.8} parent=0 // pred_check_branch
    %3 = sbr.rel (0) target = $region5
  $region4: #{tile.8} parent=0 // pred_region
    _
  $region5: #{tile.8} parent=0 // pred_fallthru
    _
  %v4 = vld [vmem:[%s0] ss:$0 sm:$0xff]
  %5 = vst [vmem:[%s1] sm:$0x3] %v4

// kernel: tile.0
$region0: #{tile.0}
  %s0 = inlined_call_operand.vmem [shape: f32[2,4], index: 0, kind: input, shape index: {}]
  %s1 = inlined_call_operand.vmem [shape: f32[8,1], index: 1, kind: output, shape index: {}]
  $region1: #{tile.0} parent=0
    #allocation0 [shape = 'u8[4096]{0}', space=vmem, size = 0x1000, scoped, tag = 'scoped mem for input reshape']
    %s3 = sshllo.u32 0, 2
    %v4 = vld [vmem:[%s0] sm:%s3]
    %5 = vst [vmem:[#allocation0] sm:%s3] %v4
    %v6 = vld [vmem:[#allocation0] sm:$0x3]
    %vm7 = vcmask 7168
    %8 = vst.msk [vmem:[%s1] ss:$4 sm:$0x3] %vm7, %v6
    %v9 = vld [vmem:[#allocation0] sm:$0x3]
    %10 = vrot.lane.b32.xlu0 %v9, 127
    %v11 = vpop.permute.xlu0 %10
    %vm12 = vcmask 7168
    %s13 = scalar_lea.vmem %s1, 1
    %14 = vst.msk [vmem:[%s13] ss:$4 sm:$0x3] %vm12, %v11
    %v15 = vld [vmem:[#allocation0] sm:$0x3]
    %16 = vrot.lane.b32.xlu0 %v15, 126
    %v17 = vpop.permute.xlu0 %16
    %vm18 = vcmask 7168
    %s19 = scalar_lea.vmem %s1, 2
    %20 = vst.msk [vmem:[%s19] ss:$4 sm:$0x3] %vm18, %v17
    %v21 = vld [vmem:[#allocation0] sm:$0x3]
    %22 = vrot.lane.b32.xlu0 %v21, 125
    %v23 = vpop.permute.xlu0 %22
    %vm24 = vcmask 7168
    %s25 = scalar_lea.vmem %s1, 3
    %26 = vst.msk [vmem:[%s25] ss:$4 sm:$0x3] %vm24, %v23

// kernel: input_scaled_gelu.1
$region0: #{input_scaled_gelu.1}
  #allocation0 [shape = 'u32[]', space=smem, size = 0x4, offset = 0x4, fixed_abs, tag = 'smem constant byte address 0x4 - core index']
  #allocation1 [shape = 'u32[144,128]{1,0:T(1,128)}', space=vmem, size = 0x12000, scoped, tag = 'internal scratch']
  %s0 = inlined_call_operand.vmem [shape: f32[8,1], index: 0, kind: input, shape index: {}]
  %s1 = inlined_call_operand.vmem [shape: f32[8,256], index: 1, kind: input, shape index: {}]
  %s2 = inlined_call_operand.vmem [shape: f32[8,256], index: 2, kind: output, shape index: {}]
  %s3 = sld [smem:[#allocation0]]
  $region18: #{input_scaled_gelu.1} parent=0
    _
  %s5 = ssub.s32 1, %s3
  %s6 = scalar_select 0, %s5, %s3
  // Predicated region
  $region2: #{input_scaled_gelu.1} parent=0 // pred_check
    _
  $region3: #{input_scaled_gelu.1} parent=0 // pred_check_branch
    %8 = sbr.rel (0) target = $region5
  $region4: #{input_scaled_gelu.1} parent=0 // pred_region
    _
  $region5: #{input_scaled_gelu.1} parent=0 // pred_fallthru
    _
  // Predicated region
  $region6: #{input_scaled_gelu.1} parent=0 // pred_check
    _
  $region7: #{input_scaled_gelu.1} parent=0 // pred_check_branch
    %10 = sbr.rel (0) target = $region9
  $region8: #{input_scaled_gelu.1} parent=0 // pred_region
    _
  $region9: #{input_scaled_gelu.1} parent=0 // pred_fallthru
    _
  %v11 = vld [vmem:[%s1] sm:$0xff]
  %v12 = vld [vmem:[%s1 + $0x8] sm:$0xff]
  %v13 = vld [vmem:[%s0] sm:$0xff]
  %15 = vset.pattern.permute.xlu0 0
  %16 = vperm.xlu0 %15, %v13
  %v17 = vpop.permute.xlu0 %16
  %v19 = vmul.f32 %v17, %v11
  %v20 = vmul.f32 %v17, %v12
  %v21 = vmul.f32 %v19, 0.5
  %v22 = vmul.f32 %v20, 0.5
  %v23 = vmul.f32 %v19, 0.70710677
  %v24 = vmul.f32 %v20, 0.70710677
  %v25 = verf.f32.pop %v23
  %v26 = verf.f32.pop %v24
  %v27 = vadd.f32 %v25, 1.0
  %v28 = vadd.f32 %v26, 1.0
  %v29 = vmul.f32 %v21, %v27
  %v30 = vmul.f32 %v22, %v28
  %31 = vst [vmem:[%s2] sm:$0xff] %v29
  %32 = vst [vmem:[%s2 + $0x8] sm:$0xff] %v30
  // Predicated region
  $region10: #{input_scaled_gelu.1} parent=0 // pred_check
    _
  $region11: #{input_scaled_gelu.1} parent=0 // pred_check_branch
    %34 = sbr.rel (0) target = $region13
  $region12: #{input_scaled_gelu.1} parent=0 // pred_region
    _
  $region13: #{input_scaled_gelu.1} parent=0 // pred_fallthru
    _
  // Predicated region
  $region14: #{input_scaled_gelu.1} parent=0 // pred_check
    _
  $region15: #{input_scaled_gelu.1} parent=0 // pred_check_branch
    %36 = sbr.rel (0) target = $region17
  $region16: #{input_scaled_gelu.1} parent=0 // pred_region
    _
  $region17: #{input_scaled_gelu.1} parent=0 // pred_fallthru
    _

</llo_original>
